<compile_context>
chip_gen: v7x
topology: tpu7x:2x2x1
jax: 0.10.0
libtpu: 0.0.40
codegen_flags: <defaults>
</compile_context>

<pallas_src>
import functools

import jax
import jax.numpy as jnp
from jax import lax
from jax.experimental import pallas as pl
from jax.experimental.pallas import tpu as pltpu


def _sigmoid(h):
    # Single EUP op (tanh); the mul/adds ride the VALU, which has large slack.
    return 0.5 * jnp.tanh(0.5 * h) + 0.5


def _mlp_kernel(x_ref, w1_ref, b1_ref, w2_ref, b2_ref, w3_ref, b3_ref, o_ref):
    x_blk = x_ref[...]  # (batch_tile, n1) f32, natural layout straight from HBM

    # Layer 1: contract over n1 (dim 1 of both operands) -> (16, batch_tile).
    # Batch lands on the lane axis, so everything downstream is lane-dense.
    h1 = _sigmoid(
        lax.dot_general(
            w1_ref[...], x_blk, (((1,), (1,)), ((), ())),
            preferred_element_type=jnp.float32,
        )
        + b1_ref[...]
    )  # (16, batch_tile)

    h2 = _sigmoid(
        jnp.dot(w2_ref[...], h1, preferred_element_type=jnp.float32) + b2_ref[...]
    )  # (8, batch_tile)

    h3 = _sigmoid(
        jnp.dot(w3_ref[...], h2, preferred_element_type=jnp.float32) + b3_ref[...]
    )  # (n2, batch_tile)

    # Tiny in-kernel transpose (XLU) so the kernel emits natural (batch, n2)
    # and no wrapper-side transpose / extra op launch is needed.
    o_ref[...] = h3.T.astype(o_ref.dtype)


@functools.partial(jax.jit, static_argnames=("batch_tile",))
def mlp_pallas(x, params, *, batch_tile=None):
    """x: (B, n1) float32.  params: w* in PyTorch (out, in) layout, b* as (out, 1).

    Returns (B, n2) float32, matching nn.Sequential(Linear, Sigmoid, ...)(x).
    """
    B, n1 = x.shape
    w1, b1 = params["w1"], params["b1"]  # (16, n1), (16, 1)
    w2, b2 = params["w2"], params["b2"]  # (8, 16),  (8, 1)
    w3, b3 = params["w3"], params["b3"]  # (n2, 8),  (n2, 1)
    n2 = w3.shape[0]

    if batch_tile is None:
        # ~B/2 rounded up to a multiple of 128 (lane-dense), capped at 8192:
        # grid >= 2 "parallel" steps for v7x's two TensorCores, large tiles
        # for big B; x tile is only n1*batch_tile*4 B so VMEM never binds.
        per_core = -(-B // 2)
        batch_tile = min(8192, max(128, -(-per_core // 128) * 128))

    grid_b = pl.cdiv(B, batch_tile)  # ragged last block handled by Pallas masking

    x_spec = pl.BlockSpec((batch_tile, n1), lambda i: (i, 0))
    o_spec = pl.BlockSpec((batch_tile, n2), lambda i: (i, 0))
    # Full-array blocks with a constant index_map: DMA'd once, kept resident.
    full = lambda a: pl.BlockSpec(a.shape, lambda i: (0, 0))

    cost = pl.CostEstimate(
        flops=2 * B * (n1 * 16 + 16 * 8 + 8 * n2),
        transcendentals=B * (16 + 8 + n2),
        bytes_accessed=4 * (B * (n1 + n2) + 16 * n1 + 16 + 16 * 8 + 8 + 8 * n2 + n2),
    )

    return pl.pallas_call(
        _mlp_kernel,
        out_shape=jax.ShapeDtypeStruct((B, n2), x.dtype),
        grid_spec=pltpu.PrefetchScalarGridSpec(
            num_scalar_prefetch=0,
            grid=(grid_b,),
            in_specs=[
                x_spec,
                full(w1), full(b1),
                full(w2), full(b2),
                full(w3), full(b3),
            ],
            out_specs=o_spec,
        ),
        compiler_params=pltpu.CompilerParams(
            dimension_semantics=("parallel",),  # batch grid shards across v7x's 2 TCs
        ),
        cost_estimate=cost,
    )(x, w1, b1, w2, b2, w3, b3)


def init_mlp_params(key, n1, n2):
    """Deterministic init matching nn.Linear's default U(-1/sqrt(fan_in), 1/sqrt(fan_in)).
    Weights in PyTorch (out_features, in_features) layout; biases as (out_features, 1)."""
    dims = [(n1, 16), (16, 8), (8, n2)]
    params = {}
    keys = jax.random.split(key, 2 * len(dims))
    for idx, (fan_in, fan_out) in enumerate(dims):
        bound = 1.0 / jnp.sqrt(jnp.float32(fan_in))
        w = jax.random.uniform(keys[2 * idx], (fan_out, fan_in),
                               dtype=jnp.float32, minval=-bound, maxval=bound)
        b = jax.random.uniform(keys[2 * idx + 1], (fan_out, 1),
                               dtype=jnp.float32, minval=-bound, maxval=bound)
        params[f"w{idx + 1}"] = w
        params[f"b{idx + 1}"] = b
    return params


def mlp_ref(x, params):
    """Pure-JAX reference matching the PyTorch module (y = x @ W.T + b)."""
    h = jax.nn.sigmoid(x @ params["w1"].T + params["b1"].T)
    h = jax.nn.sigmoid(h @ params["w2"].T + params["b2"].T)
    h = jax.nn.sigmoid(h @ params["w3"].T + params["b3"].T)
    return h


if __name__ == "__main__":
    key = jax.random.PRNGKey(0)
    k_x, k_p, k_x2 = jax.random.split(key, 3)

    # set_input_output(n1=32, n2=4); B=1024 -> auto batch_tile=512, grid of 2
    # "parallel" steps (both v7x TensorCores), lane-dense 512-wide batch tile.
    B, n1, n2 = 1024, 32, 4
    x = jax.random.normal(k_x, (B, n1), dtype=jnp.float32)
    params = init_mlp_params(k_p, n1, n2)

    out = jax.block_until_ready(mlp_pallas(x, params))
    ref = mlp_ref(x, params)
    assert out.shape == (B, n2)
    assert jnp.allclose(out, ref, atol=2e-3, rtol=2e-3), "mismatch vs reference"

    # Ragged-tail check: B not a multiple of the batch tile (grid = cdiv path,
    # out-of-bounds rows of the last block are masked on writeback).
    B2 = 300
    x2 = jax.random.normal(k_x2, (B2, n1), dtype=jnp.float32)
    out2 = jax.block_until_ready(mlp_pallas(x2, params))
    ref2 = mlp_ref(x2, params)
    assert out2.shape == (B2, n2)
    assert jnp.allclose(out2, ref2, atol=2e-3, rtol=2e-3), "ragged-tail mismatch"

    print("KERNEL_OK")
</pallas_src>

<mosaic_0001>
module attributes {stable_mosaic.version = 11 : i64} {
  func.func @_mlp_kernel(%arg0: i32, %arg1: memref<512x32xf32, #tpu.memory_space<vmem>>, %arg2: memref<16x32xf32, #tpu.memory_space<vmem>>, %arg3: memref<16x1xf32, #tpu.memory_space<vmem>>, %arg4: memref<8x16xf32, #tpu.memory_space<vmem>>, %arg5: memref<8x1xf32, #tpu.memory_space<vmem>>, %arg6: memref<4x8xf32, #tpu.memory_space<vmem>>, %arg7: memref<4x1xf32, #tpu.memory_space<vmem>>, %arg8: memref<512x4xf32, #tpu.memory_space<vmem>>) attributes {dimension_semantics = [#tpu.dimension_semantics<parallel>], iteration_bounds = array<i64: 2>, scalar_prefetch = 0 : i64, scratch_operands = 0 : i64, tpu.core_type = #tpu.core_type<tc>, window_params = [{transform_indices = @transform_0, window_bounds = array<i64: 512, 32>}, {pipeline_mode = #tpu.pipeline_mode<synchronous>, transform_indices = @transform_1, window_bounds = array<i64: 16, 32>}, {pipeline_mode = #tpu.pipeline_mode<synchronous>, transform_indices = @transform_2, window_bounds = array<i64: 16, 1>}, {pipeline_mode = #tpu.pipeline_mode<synchronous>, transform_indices = @transform_3, window_bounds = array<i64: 8, 16>}, {pipeline_mode = #tpu.pipeline_mode<synchronous>, transform_indices = @transform_4, window_bounds = array<i64: 8, 1>}, {pipeline_mode = #tpu.pipeline_mode<synchronous>, transform_indices = @transform_5, window_bounds = array<i64: 4, 8>}, {pipeline_mode = #tpu.pipeline_mode<synchronous>, transform_indices = @transform_6, window_bounds = array<i64: 4, 1>}, {transform_indices = @transform_7, window_bounds = array<i64: 512, 4>}]} {
    %c0 = arith.constant 0 : index
    %c0_0 = arith.constant 0 : index
    %0 = vector.load %arg1[%c0, %c0_0] : memref<512x32xf32, #tpu.memory_space<vmem>>, vector<512x32xf32>
    %c0_1 = arith.constant 0 : index
    %c0_2 = arith.constant 0 : index
    %1 = vector.load %arg2[%c0_1, %c0_2] : memref<16x32xf32, #tpu.memory_space<vmem>>, vector<16x32xf32>
    %cst = arith.constant dense<0.000000e+00> : vector<16x512xf32>
    %2 = tpu.matmul %1, %0, %cst {dimension_numbers = #tpu.dot_dimension_numbers<[1], [1], [0], [0], [0, 0, 1, 0], [], []>} : vector<16x32xf32>, vector<512x32xf32>, vector<16x512xf32> -> vector<16x512xf32>
    %c0_3 = arith.constant 0 : index
    %c0_4 = arith.constant 0 : index
    %3 = vector.load %arg3[%c0_3, %c0_4] : memref<16x1xf32, #tpu.memory_space<vmem>>, vector<16x1xf32>
    %4 = vector.broadcast %3 : vector<16x1xf32> to vector<16x512xf32>
    %5 = arith.addf %2, %4 : vector<16x512xf32>
    %cst_5 = arith.constant 5.000000e-01 : f32
    %6 = vector.broadcast %cst_5 : f32 to vector<16x512xf32>
    %7 = arith.mulf %6, %5 : vector<16x512xf32>
    %8 = math.tanh %7 : vector<16x512xf32>
    %cst_6 = arith.constant 5.000000e-01 : f32
    %9 = vector.broadcast %cst_6 : f32 to vector<16x512xf32>
    %10 = arith.mulf %9, %8 : vector<16x512xf32>
    %cst_7 = arith.constant 5.000000e-01 : f32
    %11 = vector.broadcast %cst_7 : f32 to vector<16x512xf32>
    %12 = arith.addf %10, %11 : vector<16x512xf32>
    %c0_8 = arith.constant 0 : index
    %c0_9 = arith.constant 0 : index
    %13 = vector.load %arg4[%c0_8, %c0_9] : memref<8x16xf32, #tpu.memory_space<vmem>>, vector<8x16xf32>
    %cst_10 = arith.constant dense<0.000000e+00> : vector<8x512xf32>
    %14 = tpu.matmul %13, %12, %cst_10 {dimension_numbers = #tpu.dot_dimension_numbers<[1], [0], [0], [1], [0, 0, 1, 1], [], []>} : vector<8x16xf32>, vector<16x512xf32>, vector<8x512xf32> -> vector<8x512xf32>
    %c0_11 = arith.constant 0 : index
    %c0_12 = arith.constant 0 : index
    %15 = vector.load %arg5[%c0_11, %c0_12] : memref<8x1xf32, #tpu.memory_space<vmem>>, vector<8x1xf32>
    %16 = vector.broadcast %15 : vector<8x1xf32> to vector<8x512xf32>
    %17 = arith.addf %14, %16 : vector<8x512xf32>
    %cst_13 = arith.constant 5.000000e-01 : f32
    %18 = vector.broadcast %cst_13 : f32 to vector<8x512xf32>
    %19 = arith.mulf %18, %17 : vector<8x512xf32>
    %20 = math.tanh %19 : vector<8x512xf32>
    %cst_14 = arith.constant 5.000000e-01 : f32
    %21 = vector.broadcast %cst_14 : f32 to vector<8x512xf32>
    %22 = arith.mulf %21, %20 : vector<8x512xf32>
    %cst_15 = arith.constant 5.000000e-01 : f32
    %23 = vector.broadcast %cst_15 : f32 to vector<8x512xf32>
    %24 = arith.addf %22, %23 : vector<8x512xf32>
    %c0_16 = arith.constant 0 : index
    %c0_17 = arith.constant 0 : index
    %25 = vector.load %arg6[%c0_16, %c0_17] : memref<4x8xf32, #tpu.memory_space<vmem>>, vector<4x8xf32>
    %cst_18 = arith.constant dense<0.000000e+00> : vector<4x512xf32>
    %26 = tpu.matmul %25, %24, %cst_18 {dimension_numbers = #tpu.dot_dimension_numbers<[1], [0], [0], [1], [0, 0, 1, 1], [], []>} : vector<4x8xf32>, vector<8x512xf32>, vector<4x512xf32> -> vector<4x512xf32>
    %c0_19 = arith.constant 0 : index
    %c0_20 = arith.constant 0 : index
    %27 = vector.load %arg7[%c0_19, %c0_20] : memref<4x1xf32, #tpu.memory_space<vmem>>, vector<4x1xf32>
    %28 = vector.broadcast %27 : vector<4x1xf32> to vector<4x512xf32>
    %29 = arith.addf %26, %28 : vector<4x512xf32>
    %cst_21 = arith.constant 5.000000e-01 : f32
    %30 = vector.broadcast %cst_21 : f32 to vector<4x512xf32>
    %31 = arith.mulf %30, %29 : vector<4x512xf32>
    %32 = math.tanh %31 : vector<4x512xf32>
    %cst_22 = arith.constant 5.000000e-01 : f32
    %33 = vector.broadcast %cst_22 : f32 to vector<4x512xf32>
    %34 = arith.mulf %33, %32 : vector<4x512xf32>
    %cst_23 = arith.constant 5.000000e-01 : f32
    %35 = vector.broadcast %cst_23 : f32 to vector<4x512xf32>
    %36 = arith.addf %34, %35 : vector<4x512xf32>
    %37 = tpu.transpose %36, [1, 0] : vector<4x512xf32> -> vector<512x4xf32>
    %c0_24 = arith.constant 0 : index
    %c0_25 = arith.constant 0 : index
    %38 = vector.load %arg8[%c0_24, %c0_25] : memref<512x4xf32, #tpu.memory_space<vmem>>, vector<512x4xf32>
    tpu.vector_store %arg8[%c0_24, %c0_25], %37 {strides = array<i32>} : memref<512x4xf32, #tpu.memory_space<vmem>>, vector<512x4xf32>,
    return
  }
  func.func @transform_0(%arg0: i32) -> (i32, i32) {
    %c0_i32 = arith.constant 0 : i32
    %c0_i32_0 = arith.constant 0 : i32
    return %arg0, %c0_i32 : i32, i32
  }
  func.func @transform_1(%arg0: i32) -> (i32, i32) {
    %c0_i32 = arith.constant 0 : i32
    %c0_i32_0 = arith.constant 0 : i32
    %c0_i32_1 = arith.constant 0 : i32
    return %c0_i32, %c0_i32_0 : i32, i32
  }
  func.func @transform_2(%arg0: i32) -> (i32, i32) {
    %c0_i32 = arith.constant 0 : i32
    %c0_i32_0 = arith.constant 0 : i32
    %c0_i32_1 = arith.constant 0 : i32
    return %c0_i32, %c0_i32_0 : i32, i32
  }
  func.func @transform_3(%arg0: i32) -> (i32, i32) {
    %c0_i32 = arith.constant 0 : i32
    %c0_i32_0 = arith.constant 0 : i32
    %c0_i32_1 = arith.constant 0 : i32
    return %c0_i32, %c0_i32_0 : i32, i32
  }
  func.func @transform_4(%arg0: i32) -> (i32, i32) {
    %c0_i32 = arith.constant 0 : i32
    %c0_i32_0 = arith.constant 0 : i32
    %c0_i32_1 = arith.constant 0 : i32
    return %c0_i32, %c0_i32_0 : i32, i32
  }
  func.func @transform_5(%arg0: i32) -> (i32, i32) {
    %c0_i32 = arith.constant 0 : i32
    %c0_i32_0 = arith.constant 0 : i32
    %c0_i32_1 = arith.constant 0 : i32
    return %c0_i32, %c0_i32_0 : i32, i32
  }
  func.func @transform_6(%arg0: i32) -> (i32, i32) {
    %c0_i32 = arith.constant 0 : i32
    %c0_i32_0 = arith.constant 0 : i32
    %c0_i32_1 = arith.constant 0 : i32
    return %c0_i32, %c0_i32_0 : i32, i32
  }
  func.func @transform_7(%arg0: i32) -> (i32, i32) {
    %c0_i32 = arith.constant 0 : i32
    %c0_i32_0 = arith.constant 0 : i32
    return %arg0, %c0_i32 : i32, i32
  }
}

</mosaic_0001>

<llo_original>
// kernel: mlp_pallas.1
$region0: #{mlp_pallas.1}
  #allocation0 [shape = 'u32[]', space=smem, size = 0x4, offset = 0x4, fixed_abs, tag = 'smem constant byte address 0x4 - core index']
  #allocation1 [shape = 'u32[144,128]{1,0:T(1,128)}', space=vmem, size = 0x12000, scoped, tag = 'internal scratch']
  %s0 = inlined_call_operand.vmem [shape: f32[1024,32], index: 0, kind: input, shape index: {}]
  %s1 = inlined_call_operand.vmem [shape: f32[16,32], index: 1, kind: input, shape index: {}]
  %s2 = inlined_call_operand.vmem [shape: f32[16,1], index: 2, kind: input, shape index: {}]
  %s3 = inlined_call_operand.vmem [shape: f32[8,16], index: 3, kind: input, shape index: {}]
  %s4 = inlined_call_operand.vmem [shape: f32[8,1], index: 4, kind: input, shape index: {}]
  %s5 = inlined_call_operand.vmem [shape: f32[4,8], index: 5, kind: input, shape index: {}]
  %s6 = inlined_call_operand.vmem [shape: f32[4,1], index: 6, kind: input, shape index: {}]
  %s7 = inlined_call_operand.vmem [shape: f32[1024,4], index: 7, kind: output, shape index: {}]
  %s8 = sld [smem:[#allocation0]]
  $region61: #{mlp_pallas.1} parent=0
    _
  %s10 = ssub.s32 1, %s8
  %s11 = scalar_select 0, %s10, %s8
  loop: start=0, step=1, limit=4
  $region2: #{mlp_pallas.1} parent=0 // loop_pre_header
    _
  $region3: #{mlp_pallas.1} parent=0 // loop_header
    %s13 = sphi 0, %s17
    %p14 = scmp.ge.s32.totalorder %s13, 4
    %s23 = sphi 0, %s25
    %s26 = sphi 0, %s23
    %s27 = sphi 0, %s26
    %s43 = sphi 0, %s27
    %s47 = sphi 0, %s47
    %s49 = sphi 0, %s47
    %s50 = sphi 0, %s49
    %s64 = sphi 0, %s50
    %s68 = sphi 0, %s68
    %s70 = sphi 0, %s68
    %s71 = sphi 0, %s70
    %s85 = sphi 0, %s71
    %s89 = sphi 0, %s89
    %s91 = sphi 0, %s89
    %s92 = sphi 0, %s91
    %s106 = sphi 0, %s92
    %s110 = sphi 0, %s110
    %s112 = sphi 0, %s110
    %s113 = sphi 0, %s112
    %s127 = sphi 0, %s113
    %s131 = sphi 0, %s131
    %s133 = sphi 0, %s131
    %s134 = sphi 0, %s133
    %s148 = sphi 0, %s134
    %s152 = sphi 0, %s152
    %s154 = sphi 0, %s152
    %s155 = sphi 0, %s154
    %s169 = sphi 0, %s155
    %s175 = sphi 0, %s177
    %s178 = sphi 0, %s175
    %s179 = sphi 0, %s178
    %s195 = sphi 0, %s179
  $region4: #{mlp_pallas.1} parent=0 // loop_header_branch
    %16 = sbr.rel (%p14) target = $region8
  $region5: #{mlp_pallas.1} parent=0 // loop_body
    %s18 = ssub.s32 %s13, 1
    %s19 = ssub.s32 %s13, 2
    %s20 = sadd.s32 %s13, 1
    %s21 = ssub.s32 %s13, %s20
    %p22 = scmp.eq.s32.totalorder %s21, 0
    %s24 = sadd.s32 %s23, 1
    %s25 = scalar_select %p22, %s23, %s24
    %p28 = pneg %p22
    %p29 = scmp.eq.s32.totalorder %s13, 1
    %p30 = por %p28, %p29
    %p31 = scmp.ne.s32.totalorder %s23, %s26
    %p32 = scmp.eq.s32.totalorder %s13, 0
    %p33 = por %p31, %p32
    %p34 = scmp.ne.s32.totalorder %s23, %s26
    %p35 = scmp.eq.s32.totalorder %s18, 1
    %p36 = por %p34, %p35
    %p37 = scmp.ne.s32.totalorder %s26, %s27
    %p38 = scmp.eq.s32.totalorder %s18, 0
    %p39 = por %p37, %p38
    %p40 = scmp.ne.s32.totalorder %s26, %s27
    %p41 = scmp.eq.s32.totalorder %s19, 1
    %p42 = por %p40, %p41
    %p44 = scmp.ne.s32.totalorder %s27, %s43
    %p45 = scmp.eq.s32.totalorder %s19, 0
    %p46 = por %p44, %p45
    %s48 = sadd.s32 %s47, 1
    %p51 = scmp.eq.s32.totalorder %s13, 1
    %p52 = scmp.ne.s32.totalorder %s47, %s49
    %p53 = scmp.eq.s32.totalorder %s13, 0
    %p54 = por %p52, %p53
    %p55 = scmp.ne.s32.totalorder %s47, %s49
    %p56 = scmp.eq.s32.totalorder %s18, 1
    %p57 = por %p55, %p56
    %p58 = scmp.ne.s32.totalorder %s49, %s50
    %p59 = scmp.eq.s32.totalorder %s18, 0
    %p60 = por %p58, %p59
    %p61 = scmp.ne.s32.totalorder %s49, %s50
    %p62 = scmp.eq.s32.totalorder %s19, 1
    %p63 = por %p61, %p62
    %p65 = scmp.ne.s32.totalorder %s50, %s64
    %p66 = scmp.eq.s32.totalorder %s19, 0
    %p67 = por %p65, %p66
    %s69 = sadd.s32 %s68, 1
    %p72 = scmp.eq.s32.totalorder %s13, 1
    %p73 = scmp.ne.s32.totalorder %s68, %s70
    %p74 = scmp.eq.s32.totalorder %s13, 0
    %p75 = por %p73, %p74
    %p76 = scmp.ne.s32.totalorder %s68, %s70
    %p77 = scmp.eq.s32.totalorder %s18, 1
    %p78 = por %p76, %p77
    %p79 = scmp.ne.s32.totalorder %s70, %s71
    %p80 = scmp.eq.s32.totalorder %s18, 0
    %p81 = por %p79, %p80
    %p82 = scmp.ne.s32.totalorder %s70, %s71
    %p83 = scmp.eq.s32.totalorder %s19, 1
    %p84 = por %p82, %p83
    %p86 = scmp.ne.s32.totalorder %s71, %s85
    %p87 = scmp.eq.s32.totalorder %s19, 0
    %p88 = por %p86, %p87
    %s90 = sadd.s32 %s89, 1
    %p93 = scmp.eq.s32.totalorder %s13, 1
    %p94 = scmp.ne.s32.totalorder %s89, %s91
    %p95 = scmp.eq.s32.totalorder %s13, 0
    %p96 = por %p94, %p95
    %p97 = scmp.ne.s32.totalorder %s89, %s91
    %p98 = scmp.eq.s32.totalorder %s18, 1
    %p99 = por %p97, %p98
    %p100 = scmp.ne.s32.totalorder %s91, %s92
    %p101 = scmp.eq.s32.totalorder %s18, 0
    %p102 = por %p100, %p101
    %p103 = scmp.ne.s32.totalorder %s91, %s92
    %p104 = scmp.eq.s32.totalorder %s19, 1
    %p105 = por %p103, %p104
    %p107 = scmp.ne.s32.totalorder %s92, %s106
    %p108 = scmp.eq.s32.totalorder %s19, 0
    %p109 = por %p107, %p108
    %s111 = sadd.s32 %s110, 1
    %p114 = scmp.eq.s32.totalorder %s13, 1
    %p115 = scmp.ne.s32.totalorder %s110, %s112
    %p116 = scmp.eq.s32.totalorder %s13, 0
    %p117 = por %p115, %p116
    %p118 = scmp.ne.s32.totalorder %s110, %s112
    %p119 = scmp.eq.s32.totalorder %s18, 1
    %p120 = por %p118, %p119
    %p121 = scmp.ne.s32.totalorder %s112, %s113
    %p122 = scmp.eq.s32.totalorder %s18, 0
    %p123 = por %p121, %p122
    %p124 = scmp.ne.s32.totalorder %s112, %s113
    %p125 = scmp.eq.s32.totalorder %s19, 1
    %p126 = por %p124, %p125
    %p128 = scmp.ne.s32.totalorder %s113, %s127
    %p129 = scmp.eq.s32.totalorder %s19, 0
    %p130 = por %p128, %p129
    %s132 = sadd.s32 %s131, 1
    %p135 = scmp.eq.s32.totalorder %s13, 1
    %p136 = scmp.ne.s32.totalorder %s131, %s133
    %p137 = scmp.eq.s32.totalorder %s13, 0
    %p138 = por %p136, %p137
    %p139 = scmp.ne.s32.totalorder %s131, %s133
    %p140 = scmp.eq.s32.totalorder %s18, 1
    %p141 = por %p139, %p140
    %p142 = scmp.ne.s32.totalorder %s133, %s134
    %p143 = scmp.eq.s32.totalorder %s18, 0
    %p144 = por %p142, %p143
    %p145 = scmp.ne.s32.totalorder %s133, %s134
    %p146 = scmp.eq.s32.totalorder %s19, 1
    %p147 = por %p145, %p146
    %p149 = scmp.ne.s32.totalorder %s134, %s148
    %p150 = scmp.eq.s32.totalorder %s19, 0
    %p151 = por %p149, %p150
    %s153 = sadd.s32 %s152, 1
    %p156 = scmp.eq.s32.totalorder %s13, 1
    %p157 = scmp.ne.s32.totalorder %s152, %s154
    %p158 = scmp.eq.s32.totalorder %s13, 0
    %p159 = por %p157, %p158
    %p160 = scmp.ne.s32.totalorder %s152, %s154
    %p161 = scmp.eq.s32.totalorder %s18, 1
    %p162 = por %p160, %p161
    %p163 = scmp.ne.s32.totalorder %s154, %s155
    %p164 = scmp.eq.s32.totalorder %s18, 0
    %p165 = por %p163, %p164
    %p166 = scmp.ne.s32.totalorder %s154, %s155
    %p167 = scmp.eq.s32.totalorder %s19, 1
    %p168 = por %p166, %p167
    %p170 = scmp.ne.s32.totalorder %s155, %s169
    %p171 = scmp.eq.s32.totalorder %s19, 0
    %p172 = por %p170, %p171
    %s173 = ssub.s32 %s13, %s20
    %p174 = scmp.eq.s32.totalorder %s173, 0
    %s176 = sadd.s32 %s175, 1
    %s177 = scalar_select %p174, %s175, %s176
    %p180 = pneg %p174
    %p181 = scmp.eq.s32.totalorder %s13, 1
    %p182 = por %p180, %p181
    %p183 = scmp.ne.s32.totalorder %s175, %s178
    %p184 = scmp.eq.s32.totalorder %s13, 0
    %p185 = por %p183, %p184
    %p186 = scmp.ne.s32.totalorder %s175, %s178
    %p187 = scmp.eq.s32.totalorder %s18, 1
    %p188 = por %p186, %p187
    %p189 = scmp.ne.s32.totalorder %s178, %s179
    %p190 = scmp.eq.s32.totalorder %s18, 0
    %p191 = por %p189, %p190
    %p192 = scmp.ne.s32.totalorder %s178, %s179
    %p193 = scmp.eq.s32.totalorder %s19, 1
    %p194 = por %p192, %p193
    %p196 = scmp.ne.s32.totalorder %s179, %s195
    %p197 = scmp.eq.s32.totalorder %s19, 0
    %p198 = por %p196, %p197
    %p199 = scmp.le.s32.totalorder 1, %s13
    %p200 = scmp.lt.s32.totalorder %s13, 3
    %p201 = pnand %p199, %p200
    %p202 = pneg %p201
    // Predicated region
    $region9: #{mlp_pallas.1} parent=5 // pred_check
      _
    $region10: #{mlp_pallas.1} parent=5 // pred_check_branch
      %204 = sbr.rel (%p201) target = $region12
    $region11: #{mlp_pallas.1} parent=5 // pred_region
      %s205 = ssub.s32 %s13, 1
      // Predicated region
      $region13: #{mlp_pallas.1} parent=11 // pred_check
        %p206 = pneg %p60
      $region14: #{mlp_pallas.1} parent=11 // pred_check_branch
        %208 = sbr.rel (%p206) target = $region16
      $region15: #{mlp_pallas.1} parent=11 // pred_region
        _
      $region16: #{mlp_pallas.1} parent=11 // pred_fallthru
        _
      // Predicated region
      $region17: #{mlp_pallas.1} parent=11 // pred_check
        %p209 = pneg %p81
      $region18: #{mlp_pallas.1} parent=11 // pred_check_branch
        %211 = sbr.rel (%p209) target = $region20
      $region19: #{mlp_pallas.1} parent=11 // pred_region
        _
      $region20: #{mlp_pallas.1} parent=11 // pred_fallthru
        _
      // Predicated region
      $region21: #{mlp_pallas.1} parent=11 // pred_check
        %p212 = pneg %p102
      $region22: #{mlp_pallas.1} parent=11 // pred_check_branch
        %214 = sbr.rel (%p212) target = $region24
      $region23: #{mlp_pallas.1} parent=11 // pred_region
        _
      $region24: #{mlp_pallas.1} parent=11 // pred_fallthru
        _
      // Predicated region
      $region25: #{mlp_pallas.1} parent=11 // pred_check
        %p215 = pneg %p123
      $region26: #{mlp_pallas.1} parent=11 // pred_check_branch
        %217 = sbr.rel (%p215) target = $region28
      $region27: #{mlp_pallas.1} parent=11 // pred_region
        _
      $region28: #{mlp_pallas.1} parent=11 // pred_fallthru
        _
      // Predicated region
      $region29: #{mlp_pallas.1} parent=11 // pred_check
        %p218 = pneg %p144
      $region30: #{mlp_pallas.1} parent=11 // pred_check_branch
        %220 = sbr.rel (%p218) target = $region32
      $region31: #{mlp_pallas.1} parent=11 // pred_region
        _
      $region32: #{mlp_pallas.1} parent=11 // pred_fallthru
        _
      // Predicated region
      $region33: #{mlp_pallas.1} parent=11 // pred_check
        %p221 = pneg %p165
      $region34: #{mlp_pallas.1} parent=11 // pred_check_branch
        %223 = sbr.rel (%p221) target = $region36
      $region35: #{mlp_pallas.1} parent=11 // pred_region
        _
      $region36: #{mlp_pallas.1} parent=11 // pred_fallthru
        _
    $region12: #{mlp_pallas.1} parent=5 // pred_fallthru
      _
    %p224 = scmp.lt.s32.totalorder %s13, 2
    // Predicated region
    $region37: #{mlp_pallas.1} parent=5 // pred_check
      %p225 = pneg %p224
    $region38: #{mlp_pallas.1} parent=5 // pred_check_branch
      %227 = sbr.rel (%p225) target = $region40
    $region39: #{mlp_pallas.1} parent=5 // pred_region
      // Predicated region
      $region41: #{mlp_pallas.1} parent=39 // pred_check
        %p228 = pneg %p33
      $region42: #{mlp_pallas.1} parent=39 // pred_check_branch
        %230 = sbr.rel (%p228) target = $region44
      $region43: #{mlp_pallas.1} parent=39 // pred_region
        %s231 = smul.u32 64, %s13
        %p232 = scmp.lt.s32.totalorder %s231, 127
        %s233 = scalar_select %p232, %s231, 127
        %s234 = smul.addr %s233, 8
        %s235 = scalar_lea.vmem %s0, %s234
        %s236 = smul.u32 64, %s13
      $region44: #{mlp_pallas.1} parent=39 // pred_fallthru
        _
    $region40: #{mlp_pallas.1} parent=5 // pred_fallthru
      _
    %p237 = scmp.le.s32.totalorder 1, %s13
    %p238 = scmp.lt.s32.totalorder %s13, 3
    %p239 = pnand %p237, %p238
    %p240 = pneg %p239
    // Predicated region
    $region45: #{mlp_pallas.1} parent=5 // pred_check
      _
    $region46: #{mlp_pallas.1} parent=5 // pred_check_branch
      %242 = sbr.rel (%p239) target = $region48
    $region47: #{mlp_pallas.1} parent=5 // pred_region
      %s243 = ssub.s32 %s13, 1
      %s244 = smul.u32 64, %s18
      %p245 = scmp.lt.s32.totalorder %s244, 127
      %s246 = scalar_select %p245, %s244, 127
      %s247 = smul.addr %s246, 8
      %s248 = scalar_lea.vmem %s0, %s247
      %p249 = pneg %p39
      %p250 = pneg %p36
      %p251 = pneg %p60
      %p252 = pneg %p57
      %p253 = pneg %p81
      %p254 = pneg %p78
      %p255 = pneg %p102
      %p256 = pneg %p99
      %p257 = pneg %p123
      %p258 = pneg %p120
      %p259 = pneg %p144
      %p260 = pneg %p141
      %p261 = pneg %p165
      %p262 = pneg %p162
      %p263 = pneg %p191
      %p264 = pneg %p188
      %s265 = smul.u32 64, %s18
      %p266 = scmp.lt.s32.totalorder %s265, 127
      %s267 = scalar_select %p266, %s265, 127
      %s268 = smul.addr %s267, 8
      %s269 = scalar_lea.vmem %s7, %s268
      %s270 = smul.u32 64, %s18
      %p271 = scmp.lt.s32.totalorder %s270, 127
      %s272 = scalar_select %p271, %s270, 127
      %s273 = smul.addr %s272, 8
      %s274 = scalar_lea.vmem %s0, %s273
      %s275 = smul.u32 64, %s18
      %s276 = smul.u32 64, %s18
      %p277 = scmp.lt.s32.totalorder %s276, 127
      %s278 = scalar_select %p277, %s276, 127
      %s279 = smul.addr %s278, 8
      %s280 = scalar_lea.vmem %s7, %s279
      %s281 = smul.u32 64, %s18
      %v282 = vld [vmem:[%s274] sm:$0xff]
      %v283 = vld [vmem:[%s274 + $0x8] sm:$0xff]
      %v284 = vld [vmem:[%s274 + $0x10] sm:$0xff]
      %v285 = vld [vmem:[%s274 + $0x18] sm:$0xff]
      %v286 = vld [vmem:[%s274 + $0x20] sm:$0xff]
      %v287 = vld [vmem:[%s274 + $0x28] sm:$0xff]
      %v288 = vld [vmem:[%s274 + $0x30] sm:$0xff]
      %v289 = vld [vmem:[%s274 + $0x38] sm:$0xff]
      %v290 = vld [vmem:[%s274 + $0x40] sm:$0xff]
      %v291 = vld [vmem:[%s274 + $0x48] sm:$0xff]
      %v292 = vld [vmem:[%s274 + $0x50] sm:$0xff]
      %v293 = vld [vmem:[%s274 + $0x58] sm:$0xff]
      %v294 = vld [vmem:[%s274 + $0x60] sm:$0xff]
      %v295 = vld [vmem:[%s274 + $0x68] sm:$0xff]
      %v296 = vld [vmem:[%s274 + $0x70] sm:$0xff]
      %v297 = vld [vmem:[%s274 + $0x78] sm:$0xff]
      %v298 = vld [vmem:[%s274 + $0x80] sm:$0xff]
      %v299 = vld [vmem:[%s274 + $0x88] sm:$0xff]
      %v300 = vld [vmem:[%s274 + $0x90] sm:$0xff]
      %v301 = vld [vmem:[%s274 + $0x98] sm:$0xff]
      %v302 = vld [vmem:[%s274 + $0xa0] sm:$0xff]
      %v303 = vld [vmem:[%s274 + $0xa8] sm:$0xff]
      %v304 = vld [vmem:[%s274 + $0xb0] sm:$0xff]
      %v305 = vld [vmem:[%s274 + $0xb8] sm:$0xff]
      %v306 = vld [vmem:[%s274 + $0xc0] sm:$0xff]
      %v307 = vld [vmem:[%s274 + $0xc8] sm:$0xff]
      %v308 = vld [vmem:[%s274 + $0xd0] sm:$0xff]
      %v309 = vld [vmem:[%s274 + $0xd8] sm:$0xff]
      %v310 = vld [vmem:[%s274 + $0xe0] sm:$0xff]
      %v311 = vld [vmem:[%s274 + $0xe8] sm:$0xff]
      %v312 = vld [vmem:[%s274 + $0xf0] sm:$0xff]
      %v313 = vld [vmem:[%s274 + $0xf8] sm:$0xff]
      %v314 = vld [vmem:[%s274 + $0x100] sm:$0xff]
      %v315 = vld [vmem:[%s274 + $0x108] sm:$0xff]
      %v316 = vld [vmem:[%s274 + $0x110] sm:$0xff]
      %v317 = vld [vmem:[%s274 + $0x118] sm:$0xff]
      %v318 = vld [vmem:[%s274 + $0x120] sm:$0xff]
      %v319 = vld [vmem:[%s274 + $0x128] sm:$0xff]
      %v320 = vld [vmem:[%s274 + $0x130] sm:$0xff]
      %v321 = vld [vmem:[%s274 + $0x138] sm:$0xff]
      %v322 = vld [vmem:[%s274 + $0x140] sm:$0xff]
      %v323 = vld [vmem:[%s274 + $0x148] sm:$0xff]
      %v324 = vld [vmem:[%s274 + $0x150] sm:$0xff]
      %v325 = vld [vmem:[%s274 + $0x158] sm:$0xff]
      %v326 = vld [vmem:[%s274 + $0x160] sm:$0xff]
      %v327 = vld [vmem:[%s274 + $0x168] sm:$0xff]
      %v328 = vld [vmem:[%s274 + $0x170] sm:$0xff]
      %v329 = vld [vmem:[%s274 + $0x178] sm:$0xff]
      %v330 = vld [vmem:[%s274 + $0x180] sm:$0xff]
      %v331 = vld [vmem:[%s274 + $0x188] sm:$0xff]
      %v332 = vld [vmem:[%s274 + $0x190] sm:$0xff]
      %v333 = vld [vmem:[%s274 + $0x198] sm:$0xff]
      %v334 = vld [vmem:[%s274 + $0x1a0] sm:$0xff]
      %v335 = vld [vmem:[%s274 + $0x1a8] sm:$0xff]
      %v336 = vld [vmem:[%s274 + $0x1b0] sm:$0xff]
      %v337 = vld [vmem:[%s274 + $0x1b8] sm:$0xff]
      %v338 = vld [vmem:[%s274 + $0x1c0] sm:$0xff]
      %v339 = vld [vmem:[%s274 + $0x1c8] sm:$0xff]
      %v340 = vld [vmem:[%s274 + $0x1d0] sm:$0xff]
      %v341 = vld [vmem:[%s274 + $0x1d8] sm:$0xff]
      %v342 = vld [vmem:[%s274 + $0x1e0] sm:$0xff]
      %v343 = vld [vmem:[%s274 + $0x1e8] sm:$0xff]
      %v344 = vld [vmem:[%s274 + $0x1f0] sm:$0xff]
      %v345 = vld [vmem:[%s274 + $0x1f8] sm:$0xff]
      %v346 = vld [vmem:[%s1] sm:$0xff]
      %v347 = vld [vmem:[%s1 + $0x8] sm:$0xff]
      %v348 = vld [vmem:[%s2] sm:$0xff]
      %v349 = vld [vmem:[%s2 + $0x8] sm:$0xff]
      %351 = vset.pattern.permute.xlu0 0
      %352 = vperm.xlu0 %351, %v348
      %v353 = vpop.permute.xlu0 %352
      %356 = vset.pattern.permute.xlu0 0
      %357 = vperm.xlu0 %356, %v349
      %v358 = vpop.permute.xlu0 %357
      %vm360 = vcmask 261120
      %v362 = vsel %vm360, %v346, 0
      %v365 = vsel %vm360, %v347, 0
      %v368 = vsel %vm360, %v282, 0
      %v371 = vsel %vm360, %v283, 0
      %v374 = vsel %vm360, %v284, 0
      %v377 = vsel %vm360, %v285, 0
      %v380 = vsel %vm360, %v286, 0
      %v383 = vsel %vm360, %v287, 0
      %v386 = vsel %vm360, %v288, 0
      %v389 = vsel %vm360, %v289, 0
      %v392 = vsel %vm360, %v290, 0
      %v395 = vsel %vm360, %v291, 0
      %v398 = vsel %vm360, %v292, 0
      %v401 = vsel %vm360, %v293, 0
      %v404 = vsel %vm360, %v294, 0
      %v407 = vsel %vm360, %v295, 0
      %v410 = vsel %vm360, %v296, 0
      %v413 = vsel %vm360, %v297, 0
      %v416 = vsel %vm360, %v298, 0
      %v419 = vsel %vm360, %v299, 0
      %v422 = vsel %vm360, %v300, 0
      %v425 = vsel %vm360, %v301, 0
      %v428 = vsel %vm360, %v302, 0
      %v431 = vsel %vm360, %v303, 0
      %v434 = vsel %vm360, %v304, 0
      %v437 = vsel %vm360, %v305, 0
      %v440 = vsel %vm360, %v306, 0
      %v443 = vsel %vm360, %v307, 0
      %v446 = vsel %vm360, %v308, 0
      %v449 = vsel %vm360, %v309, 0
      %v452 = vsel %vm360, %v310, 0
      %v455 = vsel %vm360, %v311, 0
      %v458 = vsel %vm360, %v312, 0
      %v461 = vsel %vm360, %v313, 0
      %v464 = vsel %vm360, %v314, 0
      %v467 = vsel %vm360, %v315, 0
      %v470 = vsel %vm360, %v316, 0
      %v473 = vsel %vm360, %v317, 0
      %v476 = vsel %vm360, %v318, 0
      %v479 = vsel %vm360, %v319, 0
      %v482 = vsel %vm360, %v320, 0
      %v485 = vsel %vm360, %v321, 0
      %v488 = vsel %vm360, %v322, 0
      %v491 = vsel %vm360, %v323, 0
      %v494 = vsel %vm360, %v324, 0
      %v497 = vsel %vm360, %v325, 0
      %v500 = vsel %vm360, %v326, 0
      %v503 = vsel %vm360, %v327, 0
      %v506 = vsel %vm360, %v328, 0
      %v509 = vsel %vm360, %v329, 0
      %v512 = vsel %vm360, %v330, 0
      %v515 = vsel %vm360, %v331, 0
      %v518 = vsel %vm360, %v332, 0
      %v521 = vsel %vm360, %v333, 0
      %v524 = vsel %vm360, %v334, 0
      %v527 = vsel %vm360, %v335, 0
      %v530 = vsel %vm360, %v336, 0
      %v533 = vsel %vm360, %v337, 0
      %v536 = vsel %vm360, %v338, 0
      %v539 = vsel %vm360, %v339, 0
      %v542 = vsel %vm360, %v340, 0
      %v545 = vsel %vm360, %v341, 0
      %v548 = vsel %vm360, %v342, 0
      %v551 = vsel %vm360, %v343, 0
      %v554 = vsel %vm360, %v344, 0
      %v557 = vsel %vm360, %v345, 0
      %559 = vmatprep.subr.mxu0 0.0
      %560 = vmatpush1.xpose.msra.mxu0 %v368
      %561 = vmatprep.subr.mxu0 0.0
      %562 = vmatpush1.xpose.msra.mxu0 %v371
      %563 = vmatprep.subr.mxu0 0.0
      %564 = vmatpush1.xpose.msra.mxu0 %v374
      %565 = vmatprep.subr.mxu0 0.0
      %566 = vmatpush1.xpose.msra.mxu0 %v377
      %567 = vmatprep.subr.mxu0 0.0
      %568 = vmatpush1.xpose.msra.mxu0 %v380
      %569 = vmatprep.subr.mxu0 0.0
      %570 = vmatpush1.xpose.msra.mxu0 %v383
      %571 = vmatprep.subr.mxu0 0.0
      %572 = vmatpush1.xpose.msra.mxu0 %v386
      %573 = vmatprep.subr.mxu0 0.0
      %574 = vmatpush1.xpose.msra.mxu0 %v389
      %575 = vmatprep.subr.mxu0 0.0
      %576 = vmatpush1.xpose.msra.mxu0 %v392
      %577 = vmatprep.subr.mxu0 0.0
      %578 = vmatpush1.xpose.msra.mxu0 %v395
      %579 = vmatprep.subr.mxu0 0.0
      %580 = vmatpush1.xpose.msra.mxu0 %v398
      %581 = vmatprep.subr.mxu0 0.0
      %582 = vmatpush1.xpose.msra.mxu0 %v401
      %583 = vmatprep.subr.mxu0 0.0
      %584 = vmatpush1.xpose.msra.mxu0 %v404
      %585 = vmatprep.subr.mxu0 0.0
      %586 = vmatpush1.xpose.msra.mxu0 %v407
      %587 = vmatprep.subr.mxu0 0.0
      %588 = vmatpush1.xpose.msra.mxu0 %v410
      %589 = vmatprep.subr.mxu0 0.0
      %590 = vmatpush1.xpose.msra.mxu0 %v413
      %591 = vmatprep.subr.mxu0 0.0
      %592 = vmatpush1.xpose.msra.mxu0 %v416
      %593 = vmatprep.subr.mxu0 0.0
      %594 = vmatpush1.xpose.msra.mxu0 %v419
      %595 = vmatprep.subr.mxu0 0.0
      %596 = vmatpush1.xpose.msra.mxu0 %v422
      %597 = vmatprep.subr.mxu0 0.0
      %598 = vmatpush1.xpose.msra.mxu0 %v425
      %599 = vmatprep.subr.mxu0 0.0
      %600 = vmatpush1.xpose.msra.mxu0 %v428
      %601 = vmatprep.subr.mxu0 0.0
      %602 = vmatpush1.xpose.msra.mxu0 %v431
      %603 = vmatprep.subr.mxu0 0.0
      %604 = vmatpush1.xpose.msra.mxu0 %v434
      %605 = vmatprep.subr.mxu0 0.0
      %606 = vmatpush1.xpose.msra.mxu0 %v437
      %607 = vmatprep.subr.mxu0 0.0
      %608 = vmatpush1.xpose.msra.mxu0 %v440
      %609 = vmatprep.subr.mxu0 0.0
      %610 = vmatpush1.xpose.msra.mxu0 %v443
      %611 = vmatprep.subr.mxu0 0.0
      %612 = vmatpush1.xpose.msra.mxu0 %v446
      %613 = vmatprep.subr.mxu0 0.0
      %614 = vmatpush1.xpose.msra.mxu0 %v449
      %615 = vmatprep.subr.mxu0 0.0
      %616 = vmatpush1.xpose.msra.mxu0 %v452
      %617 = vmatprep.subr.mxu0 0.0
      %618 = vmatpush1.xpose.msra.mxu0 %v455
      %619 = vmatprep.subr.mxu0 0.0
      %620 = vmatpush1.xpose.msra.mxu0 %v458
      %621 = vmatprep.subr.mxu0 0.0
      %622 = vmatpush1.xpose.msra.mxu0 %v461
      %623 = vmatprep.mubr.f32.mxu0 0.0
      %624 = vmatmul.mubr.f32.gmra.mrb[0].mxu0 %v362
      %v625 = vpop.f32.mrb[0].mxu0
      %v626 = vadd.f32 %v353, %v625
      %v627 = vpop.f32.mrb[0].mxu0
      %v628 = vadd.f32 %v353, %v627
      %629 = vmatprep.mubr.f32.mxu0 0.0
      %630 = vmatmul.mubr.f32.gmra.mrb[0].mxu0 %v365
      %v631 = vpop.f32.mrb[0].mxu0
      %v632 = vadd.f32 %v358, %v631
      %v633 = vpop.f32.mrb[0].mxu0
      %v634 = vadd.f32 %v358, %v633
      %635 = vdwg.mxu0
      %636 = vmatprep.subr.mxu0 0.0
      %637 = vmatpush1.xpose.msra.mxu0 %v464
      %638 = vmatprep.subr.mxu0 0.0
      %639 = vmatpush1.xpose.msra.mxu0 %v467
      %640 = vmatprep.subr.mxu0 0.0
      %641 = vmatpush1.xpose.msra.mxu0 %v470
      %642 = vmatprep.subr.mxu0 0.0
      %643 = vmatpush1.xpose.msra.mxu0 %v473
      %644 = vmatprep.subr.mxu0 0.0
      %645 = vmatpush1.xpose.msra.mxu0 %v476
      %646 = vmatprep.subr.mxu0 0.0
      %647 = vmatpush1.xpose.msra.mxu0 %v479
      %648 = vmatprep.subr.mxu0 0.0
      %649 = vmatpush1.xpose.msra.mxu0 %v482
      %650 = vmatprep.subr.mxu0 0.0
      %651 = vmatpush1.xpose.msra.mxu0 %v485
      %652 = vmatprep.subr.mxu0 0.0
      %653 = vmatpush1.xpose.msra.mxu0 %v488
      %654 = vmatprep.subr.mxu0 0.0
      %655 = vmatpush1.xpose.msra.mxu0 %v491
      %656 = vmatprep.subr.mxu0 0.0
      %657 = vmatpush1.xpose.msra.mxu0 %v494
      %658 = vmatprep.subr.mxu0 0.0
      %659 = vmatpush1.xpose.msra.mxu0 %v497
      %660 = vmatprep.subr.mxu0 0.0
      %661 = vmatpush1.xpose.msra.mxu0 %v500
      %662 = vmatprep.subr.mxu0 0.0
      %663 = vmatpush1.xpose.msra.mxu0 %v503
      %664 = vmatprep.subr.mxu0 0.0
      %665 = vmatpush1.xpose.msra.mxu0 %v506
      %666 = vmatprep.subr.mxu0 0.0
      %667 = vmatpush1.xpose.msra.mxu0 %v509
      %668 = vmatprep.subr.mxu0 0.0
      %669 = vmatpush1.xpose.msra.mxu0 %v512
      %670 = vmatprep.subr.mxu0 0.0
      %671 = vmatpush1.xpose.msra.mxu0 %v515
      %672 = vmatprep.subr.mxu0 0.0
      %673 = vmatpush1.xpose.msra.mxu0 %v518
      %674 = vmatprep.subr.mxu0 0.0
      %675 = vmatpush1.xpose.msra.mxu0 %v521
      %676 = vmatprep.subr.mxu0 0.0
      %677 = vmatpush1.xpose.msra.mxu0 %v524
      %678 = vmatprep.subr.mxu0 0.0
      %679 = vmatpush1.xpose.msra.mxu0 %v527
      %680 = vmatprep.subr.mxu0 0.0
      %681 = vmatpush1.xpose.msra.mxu0 %v530
      %682 = vmatprep.subr.mxu0 0.0
      %683 = vmatpush1.xpose.msra.mxu0 %v533
      %684 = vmatprep.subr.mxu0 0.0
      %685 = vmatpush1.xpose.msra.mxu0 %v536
      %686 = vmatprep.subr.mxu0 0.0
      %687 = vmatpush1.xpose.msra.mxu0 %v539
      %688 = vmatprep.subr.mxu0 0.0
      %689 = vmatpush1.xpose.msra.mxu0 %v542
      %690 = vmatprep.subr.mxu0 0.0
      %691 = vmatpush1.xpose.msra.mxu0 %v545
      %692 = vmatprep.subr.mxu0 0.0
      %693 = vmatpush1.xpose.msra.mxu0 %v548
      %694 = vmatprep.subr.mxu0 0.0
      %695 = vmatpush1.xpose.msra.mxu0 %v551
      %696 = vmatprep.subr.mxu0 0.0
      %697 = vmatpush1.xpose.msra.mxu0 %v554
      %698 = vmatprep.subr.mxu0 0.0
      %699 = vmatpush1.xpose.msra.mxu0 %v557
      %700 = vmatprep.mubr.f32.mxu0 0.0
      %701 = vmatmul.mubr.f32.gmra.mrb[0].mxu0 %v362
      %v702 = vpop.f32.mrb[0].mxu0
      %v703 = vadd.f32 %v353, %v702
      %v704 = vpop.f32.mrb[0].mxu0
      %v705 = vadd.f32 %v353, %v704
      %706 = vmatprep.mubr.f32.mxu0 0.0
      %707 = vmatmul.mubr.f32.gmra.mrb[0].mxu0 %v365
      %v708 = vpop.f32.mrb[0].mxu0
      %v709 = vadd.f32 %v358, %v708
      %v710 = vpop.f32.mrb[0].mxu0
      %v711 = vadd.f32 %v358, %v710
      %712 = vdwg.mxu0
      %v713 = vmul.f32 %v626, 0.5
      %v714 = vmul.f32 %v628, 0.5
      %v715 = vmul.f32 %v703, 0.5
      %v716 = vmul.f32 %v705, 0.5
      %v717 = vmul.f32 %v632, 0.5
      %v718 = vmul.f32 %v634, 0.5
      %v719 = vmul.f32 %v709, 0.5
      %v720 = vmul.f32 %v711, 0.5
      %v721 = vtanh.pop %v713
      %v722 = vtanh.pop %v714
      %v723 = vtanh.pop %v715
      %v724 = vtanh.pop %v716
      %v725 = vtanh.pop %v717
      %v726 = vtanh.pop %v718
      %v727 = vtanh.pop %v719
      %v728 = vtanh.pop %v720
      %v729 = vmul.f32 %v721, 0.5
      %v730 = vmul.f32 %v722, 0.5
      %v731 = vmul.f32 %v723, 0.5
      %v732 = vmul.f32 %v724, 0.5
      %v733 = vmul.f32 %v725, 0.5
      %v734 = vmul.f32 %v726, 0.5
      %v735 = vmul.f32 %v727, 0.5
      %v736 = vmul.f32 %v728, 0.5
      %v737 = vadd.f32 %v729, 0.5
      %v738 = vadd.f32 %v730, 0.5
      %v739 = vadd.f32 %v731, 0.5
      %v740 = vadd.f32 %v732, 0.5
      %v741 = vadd.f32 %v733, 0.5
      %v742 = vadd.f32 %v734, 0.5
      %v743 = vadd.f32 %v735, 0.5
      %v744 = vadd.f32 %v736, 0.5
      %v745 = vld [vmem:[%s3] sm:$0xff]
      %v746 = vld [vmem:[%s4] sm:$0xff]
      %748 = vset.pattern.permute.xlu0 0
      %749 = vperm.xlu0 %748, %v746
      %v750 = vpop.permute.xlu0 %749
      %vm752 = vcmask 130048
      %v754 = vsel %vm752, %v745, 0
      %756 = vmatprep.subr.mxu0 %v738
      %757 = vmatpush1.msra.mxu0 %v737
      %758 = vmatprep.subr.mxu0 %v742
      %759 = vmatpush1.msra.mxu0 %v741
      %760 = vmatprep.subr.mxu0 0.0
      %761 = vmatpush1.msra.mxu0 0.0
      %762 = vmatprep.subr.mxu0 0.0
      %763 = vmatpush1.msra.mxu0 0.0
      %764 = vmatprep.subr.mxu0 0.0
      %765 = vmatpush1.msra.mxu0 0.0
      %766 = vmatprep.subr.mxu0 0.0
      %767 = vmatpush1.msra.mxu0 0.0
      %768 = vmatprep.subr.mxu0 0.0
      %769 = vmatpush1.msra.mxu0 0.0
      %770 = vmatprep.subr.mxu0 0.0
      %771 = vmatpush1.msra.mxu0 0.0
      %772 = vmatprep.subr.mxu0 0.0
      %773 = vmatpush1.msra.mxu0 0.0
      %774 = vmatprep.subr.mxu0 0.0
      %775 = vmatpush1.msra.mxu0 0.0
      %776 = vmatprep.subr.mxu0 0.0
      %777 = vmatpush1.msra.mxu0 0.0
      %778 = vmatprep.subr.mxu0 0.0
      %779 = vmatpush1.msra.mxu0 0.0
      %780 = vmatprep.subr.mxu0 0.0
      %781 = vmatpush1.msra.mxu0 0.0
      %782 = vmatprep.subr.mxu0 0.0
      %783 = vmatpush1.msra.mxu0 0.0
      %784 = vmatprep.subr.mxu0 0.0
      %785 = vmatpush1.msra.mxu0 0.0
      %786 = vmatprep.subr.mxu0 0.0
      %787 = vmatpush1.msra.mxu0 0.0
      %788 = vmatprep.subr.mxu0 0.0
      %789 = vmatpush1.msra.mxu0 0.0
      %790 = vmatprep.subr.mxu0 0.0
      %791 = vmatpush1.msra.mxu0 0.0
      %792 = vmatprep.subr.mxu0 0.0
      %793 = vmatpush1.msra.mxu0 0.0
      %794 = vmatprep.subr.mxu0 0.0
      %795 = vmatpush1.msra.mxu0 0.0
      %796 = vmatprep.subr.mxu0 0.0
      %797 = vmatpush1.msra.mxu0 0.0
      %798 = vmatprep.subr.mxu0 0.0
      %799 = vmatpush1.msra.mxu0 0.0
      %800 = vmatprep.subr.mxu0 0.0
      %801 = vmatpush1.msra.mxu0 0.0
      %802 = vmatprep.subr.mxu0 0.0
      %803 = vmatpush1.msra.mxu0 0.0
      %804 = vmatprep.subr.mxu0 0.0
      %805 = vmatpush1.msra.mxu0 0.0
      %806 = vmatprep.subr.mxu0 0.0
      %807 = vmatpush1.msra.mxu0 0.0
      %808 = vmatprep.subr.mxu0 0.0
      %809 = vmatpush1.msra.mxu0 0.0
      %810 = vmatprep.subr.mxu0 0.0
      %811 = vmatpush1.msra.mxu0 0.0
      %812 = vmatprep.subr.mxu0 0.0
      %813 = vmatpush1.msra.mxu0 0.0
      %814 = vmatprep.subr.mxu0 0.0
      %815 = vmatpush1.msra.mxu0 0.0
      %816 = vmatprep.subr.mxu0 0.0
      %817 = vmatpush1.msra.mxu0 0.0
      %818 = vmatprep.subr.mxu0 0.0
      %819 = vmatpush1.msra.mxu0 0.0
      %820 = vmatprep.mubr.f32.mxu0 0.0
      %821 = vmatmul.mubr.f32.gmra.mrb[0].mxu0 %v754
      %v822 = vpop.f32.mrb[0].mxu0
      %v823 = vadd.f32 %v750, %v822
      %v824 = vpop.f32.mrb[0].mxu0
      %v825 = vadd.f32 %v750, %v824
      %826 = vdwg.mxu0
      %827 = vmatprep.subr.mxu0 %v740
      %828 = vmatpush1.msra.mxu0 %v739
      %829 = vmatprep.subr.mxu0 %v744
      %830 = vmatpush1.msra.mxu0 %v743
      %831 = vmatprep.subr.mxu0 0.0
      %832 = vmatpush1.msra.mxu0 0.0
      %833 = vmatprep.subr.mxu0 0.0
      %834 = vmatpush1.msra.mxu0 0.0
      %835 = vmatprep.subr.mxu0 0.0
      %836 = vmatpush1.msra.mxu0 0.0
      %837 = vmatprep.subr.mxu0 0.0
      %838 = vmatpush1.msra.mxu0 0.0
      %839 = vmatprep.subr.mxu0 0.0
      %840 = vmatpush1.msra.mxu0 0.0
      %841 = vmatprep.subr.mxu0 0.0
      %842 = vmatpush1.msra.mxu0 0.0
      %843 = vmatprep.subr.mxu0 0.0
      %844 = vmatpush1.msra.mxu0 0.0
      %845 = vmatprep.subr.mxu0 0.0
      %846 = vmatpush1.msra.mxu0 0.0
      %847 = vmatprep.subr.mxu0 0.0
      %848 = vmatpush1.msra.mxu0 0.0
      %849 = vmatprep.subr.mxu0 0.0
      %850 = vmatpush1.msra.mxu0 0.0
      %851 = vmatprep.subr.mxu0 0.0
      %852 = vmatpush1.msra.mxu0 0.0
      %853 = vmatprep.subr.mxu0 0.0
      %854 = vmatpush1.msra.mxu0 0.0
      %855 = vmatprep.subr.mxu0 0.0
      %856 = vmatpush1.msra.mxu0 0.0
      %857 = vmatprep.subr.mxu0 0.0
      %858 = vmatpush1.msra.mxu0 0.0
      %859 = vmatprep.subr.mxu0 0.0
      %860 = vmatpush1.msra.mxu0 0.0
      %861 = vmatprep.subr.mxu0 0.0
      %862 = vmatpush1.msra.mxu0 0.0
      %863 = vmatprep.subr.mxu0 0.0
      %864 = vmatpush1.msra.mxu0 0.0
      %865 = vmatprep.subr.mxu0 0.0
      %866 = vmatpush1.msra.mxu0 0.0
      %867 = vmatprep.subr.mxu0 0.0
      %868 = vmatpush1.msra.mxu0 0.0
      %869 = vmatprep.subr.mxu0 0.0
      %870 = vmatpush1.msra.mxu0 0.0
      %871 = vmatprep.subr.mxu0 0.0
      %872 = vmatpush1.msra.mxu0 0.0
      %873 = vmatprep.subr.mxu0 0.0
      %874 = vmatpush1.msra.mxu0 0.0
      %875 = vmatprep.subr.mxu0 0.0
      %876 = vmatpush1.msra.mxu0 0.0
      %877 = vmatprep.subr.mxu0 0.0
      %878 = vmatpush1.msra.mxu0 0.0
      %879 = vmatprep.subr.mxu0 0.0
      %880 = vmatpush1.msra.mxu0 0.0
      %881 = vmatprep.subr.mxu0 0.0
      %882 = vmatpush1.msra.mxu0 0.0
      %883 = vmatprep.subr.mxu0 0.0
      %884 = vmatpush1.msra.mxu0 0.0
      %885 = vmatprep.subr.mxu0 0.0
      %886 = vmatpush1.msra.mxu0 0.0
      %887 = vmatprep.subr.mxu0 0.0
      %888 = vmatpush1.msra.mxu0 0.0
      %889 = vmatprep.subr.mxu0 0.0
      %890 = vmatpush1.msra.mxu0 0.0
      %891 = vmatprep.mubr.f32.mxu0 0.0
      %892 = vmatmul.mubr.f32.gmra.mrb[0].mxu0 %v754
      %v893 = vpop.f32.mrb[0].mxu0
      %v894 = vadd.f32 %v750, %v893
      %v895 = vpop.f32.mrb[0].mxu0
      %v896 = vadd.f32 %v750, %v895
      %897 = vdwg.mxu0
      %v898 = vmul.f32 %v823, 0.5
      %v899 = vmul.f32 %v825, 0.5
      %v900 = vmul.f32 %v894, 0.5
      %v901 = vmul.f32 %v896, 0.5
      %v902 = vtanh.pop %v898
      %v903 = vtanh.pop %v899
      %v904 = vtanh.pop %v900
      %v905 = vtanh.pop %v901
      %v906 = vmul.f32 %v902, 0.5
      %v907 = vmul.f32 %v903, 0.5
      %v908 = vmul.f32 %v904, 0.5
      %v909 = vmul.f32 %v905, 0.5
      %v910 = vadd.f32 %v906, 0.5
      %v911 = vadd.f32 %v907, 0.5
      %v912 = vadd.f32 %v908, 0.5
      %v913 = vadd.f32 %v909, 0.5
      %v914 = vld [vmem:[%s5] sm:$0xf]
      %v915 = vld [vmem:[%s6] sm:$0xf]
      %917 = vset.pattern.permute.xlu0 0
      %918 = vperm.xlu0 %917, %v915
      %v919 = vpop.permute.xlu0 %918
      %vm921 = vcmask 64512
      %v923 = vsel %vm921, %v914, 0
      %925 = vmatprep.subr.mxu0 %v911
      %926 = vmatpush1.msra.mxu0 %v910
      %927 = vmatprep.subr.mxu0 0.0
      %928 = vmatpush1.msra.mxu0 0.0
      %929 = vmatprep.subr.mxu0 0.0
      %930 = vmatpush1.msra.mxu0 0.0
      %931 = vmatprep.subr.mxu0 0.0
      %932 = vmatpush1.msra.mxu0 0.0
      %933 = vmatprep.subr.mxu0 0.0
      %934 = vmatpush1.msra.mxu0 0.0
      %935 = vmatprep.subr.mxu0 0.0
      %936 = vmatpush1.msra.mxu0 0.0
      %937 = vmatprep.subr.mxu0 0.0
      %938 = vmatpush1.msra.mxu0 0.0
      %939 = vmatprep.subr.mxu0 0.0
      %940 = vmatpush1.msra.mxu0 0.0
      %941 = vmatprep.subr.mxu0 0.0
      %942 = vmatpush1.msra.mxu0 0.0
      %943 = vmatprep.subr.mxu0 0.0
      %944 = vmatpush1.msra.mxu0 0.0
      %945 = vmatprep.subr.mxu0 0.0
      %946 = vmatpush1.msra.mxu0 0.0
      %947 = vmatprep.subr.mxu0 0.0
      %948 = vmatpush1.msra.mxu0 0.0
      %949 = vmatprep.subr.mxu0 0.0
      %950 = vmatpush1.msra.mxu0 0.0
      %951 = vmatprep.subr.mxu0 0.0
      %952 = vmatpush1.msra.mxu0 0.0
      %953 = vmatprep.subr.mxu0 0.0
      %954 = vmatpush1.msra.mxu0 0.0
      %955 = vmatprep.subr.mxu0 0.0
      %956 = vmatpush1.msra.mxu0 0.0
      %957 = vmatprep.subr.mxu0 0.0
      %958 = vmatpush1.msra.mxu0 0.0
      %959 = vmatprep.subr.mxu0 0.0
      %960 = vmatpush1.msra.mxu0 0.0
      %961 = vmatprep.subr.mxu0 0.0
      %962 = vmatpush1.msra.mxu0 0.0
      %963 = vmatprep.subr.mxu0 0.0
      %964 = vmatpush1.msra.mxu0 0.0
      %965 = vmatprep.subr.mxu0 0.0
      %966 = vmatpush1.msra.mxu0 0.0
      %967 = vmatprep.subr.mxu0 0.0
      %968 = vmatpush1.msra.mxu0 0.0
      %969 = vmatprep.subr.mxu0 0.0
      %970 = vmatpush1.msra.mxu0 0.0
      %971 = vmatprep.subr.mxu0 0.0
      %972 = vmatpush1.msra.mxu0 0.0
      %973 = vmatprep.subr.mxu0 0.0
      %974 = vmatpush1.msra.mxu0 0.0
      %975 = vmatprep.subr.mxu0 0.0
      %976 = vmatpush1.msra.mxu0 0.0
      %977 = vmatprep.subr.mxu0 0.0
      %978 = vmatpush1.msra.mxu0 0.0
      %979 = vmatprep.subr.mxu0 0.0
      %980 = vmatpush1.msra.mxu0 0.0
      %981 = vmatprep.subr.mxu0 0.0
      %982 = vmatpush1.msra.mxu0 0.0
      %983 = vmatprep.subr.mxu0 0.0
      %984 = vmatpush1.msra.mxu0 0.0
      %985 = vmatprep.subr.mxu0 0.0
      %986 = vmatpush1.msra.mxu0 0.0
      %987 = vmatprep.subr.mxu0 0.0
      %988 = vmatpush1.msra.mxu0 0.0
      %989 = vmatprep.mubr.f32.mxu0 0.0
      %990 = vmatmul.mubr.f32.gmra.mrb[0].mxu0 %v923
      %v991 = vpop.f32.mrb[0].mxu0
      %v992 = vadd.f32 %v919, %v991
      %v993 = vpop.f32.mrb[0].mxu0
      %v994 = vadd.f32 %v919, %v993
      %995 = vdwg.mxu0
      %996 = vmatprep.subr.mxu0 %v913
      %997 = vmatpush1.msra.mxu0 %v912
      %998 = vmatprep.subr.mxu0 0.0
      %999 = vmatpush1.msra.mxu0 0.0
      %1000 = vmatprep.subr.mxu0 0.0
      %1001 = vmatpush1.msra.mxu0 0.0
      %1002 = vmatprep.subr.mxu0 0.0
      %1003 = vmatpush1.msra.mxu0 0.0
      %1004 = vmatprep.subr.mxu0 0.0
      %1005 = vmatpush1.msra.mxu0 0.0
      %1006 = vmatprep.subr.mxu0 0.0
      %1007 = vmatpush1.msra.mxu0 0.0
      %1008 = vmatprep.subr.mxu0 0.0
      %1009 = vmatpush1.msra.mxu0 0.0
      %1010 = vmatprep.subr.mxu0 0.0
      %1011 = vmatpush1.msra.mxu0 0.0
      %1012 = vmatprep.subr.mxu0 0.0
      %1013 = vmatpush1.msra.mxu0 0.0
      %1014 = vmatprep.subr.mxu0 0.0
      %1015 = vmatpush1.msra.mxu0 0.0
      %1016 = vmatprep.subr.mxu0 0.0
      %1017 = vmatpush1.msra.mxu0 0.0
      %1018 = vmatprep.subr.mxu0 0.0
      %1019 = vmatpush1.msra.mxu0 0.0
      %1020 = vmatprep.subr.mxu0 0.0
      %1021 = vmatpush1.msra.mxu0 0.0
      %1022 = vmatprep.subr.mxu0 0.0
      %1023 = vmatpush1.msra.mxu0 0.0
      %1024 = vmatprep.subr.mxu0 0.0
      %1025 = vmatpush1.msra.mxu0 0.0
      %1026 = vmatprep.subr.mxu0 0.0
      %1027 = vmatpush1.msra.mxu0 0.0
      %1028 = vmatprep.subr.mxu0 0.0
      %1029 = vmatpush1.msra.mxu0 0.0
      %1030 = vmatprep.subr.mxu0 0.0
      %1031 = vmatpush1.msra.mxu0 0.0
      %1032 = vmatprep.subr.mxu0 0.0
      %1033 = vmatpush1.msra.mxu0 0.0
      %1034 = vmatprep.subr.mxu0 0.0
      %1035 = vmatpush1.msra.mxu0 0.0
      %1036 = vmatprep.subr.mxu0 0.0
      %1037 = vmatpush1.msra.mxu0 0.0
      %1038 = vmatprep.subr.mxu0 0.0
      %1039 = vmatpush1.msra.mxu0 0.0
      %1040 = vmatprep.subr.mxu0 0.0
      %1041 = vmatpush1.msra.mxu0 0.0
      %1042 = vmatprep.subr.mxu0 0.0
      %1043 = vmatpush1.msra.mxu0 0.0
      %1044 = vmatprep.subr.mxu0 0.0
      %1045 = vmatpush1.msra.mxu0 0.0
      %1046 = vmatprep.subr.mxu0 0.0
      %1047 = vmatpush1.msra.mxu0 0.0
      %1048 = vmatprep.subr.mxu0 0.0
      %1049 = vmatpush1.msra.mxu0 0.0
      %1050 = vmatprep.subr.mxu0 0.0
      %1051 = vmatpush1.msra.mxu0 0.0
      %1052 = vmatprep.subr.mxu0 0.0
      %1053 = vmatpush1.msra.mxu0 0.0
      %1054 = vmatprep.subr.mxu0 0.0
      %1055 = vmatpush1.msra.mxu0 0.0
      %1056 = vmatprep.subr.mxu0 0.0
      %1057 = vmatpush1.msra.mxu0 0.0
      %1058 = vmatprep.subr.mxu0 0.0
      %1059 = vmatpush1.msra.mxu0 0.0
      %1060 = vmatprep.mubr.f32.mxu0 0.0
      %1061 = vmatmul.mubr.f32.gmra.mrb[0].mxu0 %v923
      %v1062 = vpop.f32.mrb[0].mxu0
      %v1063 = vadd.f32 %v919, %v1062
      %v1064 = vpop.f32.mrb[0].mxu0
      %v1065 = vadd.f32 %v919, %v1064
      %1066 = vdwg.mxu0
      %v1067 = vmul.f32 %v992, 0.5
      %v1068 = vmul.f32 %v994, 0.5
      %v1069 = vmul.f32 %v1063, 0.5
      %v1070 = vmul.f32 %v1065, 0.5
      %v1071 = vtanh.pop %v1067
      %v1072 = vtanh.pop %v1068
      %v1073 = vtanh.pop %v1069
      %v1074 = vtanh.pop %v1070
      %v1075 = vmul.f32 %v1071, 0.5
      %v1076 = vmul.f32 %v1072, 0.5
      %v1077 = vmul.f32 %v1073, 0.5
      %v1078 = vmul.f32 %v1074, 0.5
      %v1079 = vadd.f32 %v1075, 0.5
      %v1080 = vadd.f32 %v1076, 0.5
      %v1081 = vadd.f32 %v1077, 0.5
      %v1082 = vadd.f32 %v1078, 0.5
      %1083 = vxpose.xlu0.b32.start [1/16] %v1079, 128
      %1084 = vxpose.xlu0.b32.cont [2/16] 0.0, 128
      %1085 = vxpose.xlu0.b32.cont [3/16] 0.0, 128
      %1086 = vxpose.xlu0.b32.cont [4/16] 0.0, 128
      %1087 = vxpose.xlu0.b32.cont [5/16] 0.0, 128
      %1088 = vxpose.xlu0.b32.cont [6/16] 0.0, 128
      %1089 = vxpose.xlu0.b32.cont [7/16] 0.0, 128
      %1090 = vxpose.xlu0.b32.cont [8/16] 0.0, 128
      %1091 = vxpose.xlu0.b32.cont [9/16] 0.0, 128
      %1092 = vxpose.xlu0.b32.cont [10/16] 0.0, 128
      %1093 = vxpose.xlu0.b32.cont [11/16] 0.0, 128
      %1094 = vxpose.xlu0.b32.cont [12/16] 0.0, 128
      %1095 = vxpose.xlu0.b32.cont [13/16] 0.0, 128
      %1096 = vxpose.xlu0.b32.cont [14/16] 0.0, 128
      %1097 = vxpose.xlu0.b32.cont [15/16] 0.0, 128
      %1098 = vxpose.xlu0.b32.end [16/16] 0.0, 128
      %v1099 = vpop.trf.xlu0
      %v1100 = vpop.trf.xlu0
      %v1101 = vpop.trf.xlu0
      %v1102 = vpop.trf.xlu0
      %v1103 = vpop.trf.xlu0
      %v1104 = vpop.trf.xlu0
      %v1105 = vpop.trf.xlu0
      %v1106 = vpop.trf.xlu0
      %v1107 = vpop.trf.xlu0
      %v1108 = vpop.trf.xlu0
      %v1109 = vpop.trf.xlu0
      %v1110 = vpop.trf.xlu0
      %v1111 = vpop.trf.xlu0
      %v1112 = vpop.trf.xlu0
      %v1113 = vpop.trf.xlu0
      %v1114 = vpop.trf.xlu0
      %1115 = vxpose.xlu0.b32.start [1/16] %v1080, 128
      %1116 = vxpose.xlu0.b32.cont [2/16] 0.0, 128
      %1117 = vxpose.xlu0.b32.cont [3/16] 0.0, 128
      %1118 = vxpose.xlu0.b32.cont [4/16] 0.0, 128
      %1119 = vxpose.xlu0.b32.cont [5/16] 0.0, 128
      %1120 = vxpose.xlu0.b32.cont [6/16] 0.0, 128
      %1121 = vxpose.xlu0.b32.cont [7/16] 0.0, 128
      %1122 = vxpose.xlu0.b32.cont [8/16] 0.0, 128
      %1123 = vxpose.xlu0.b32.cont [9/16] 0.0, 128
      %1124 = vxpose.xlu0.b32.cont [10/16] 0.0, 128
      %1125 = vxpose.xlu0.b32.cont [11/16] 0.0, 128
      %1126 = vxpose.xlu0.b32.cont [12/16] 0.0, 128
      %1127 = vxpose.xlu0.b32.cont [13/16] 0.0, 128
      %1128 = vxpose.xlu0.b32.cont [14/16] 0.0, 128
      %1129 = vxpose.xlu0.b32.cont [15/16] 0.0, 128
      %1130 = vxpose.xlu0.b32.end [16/16] 0.0, 128
      %v1131 = vpop.trf.xlu0
      %v1132 = vpop.trf.xlu0
      %v1133 = vpop.trf.xlu0
      %v1134 = vpop.trf.xlu0
      %v1135 = vpop.trf.xlu0
      %v1136 = vpop.trf.xlu0
      %v1137 = vpop.trf.xlu0
      %v1138 = vpop.trf.xlu0
      %v1139 = vpop.trf.xlu0
      %v1140 = vpop.trf.xlu0
      %v1141 = vpop.trf.xlu0
      %v1142 = vpop.trf.xlu0
      %v1143 = vpop.trf.xlu0
      %v1144 = vpop.trf.xlu0
      %v1145 = vpop.trf.xlu0
      %v1146 = vpop.trf.xlu0
      %1147 = vxpose.xlu0.b32.start [1/16] %v1081, 128
      %1148 = vxpose.xlu0.b32.cont [2/16] 0.0, 128
      %1149 = vxpose.xlu0.b32.cont [3/16] 0.0, 128
      %1150 = vxpose.xlu0.b32.cont [4/16] 0.0, 128
      %1151 = vxpose.xlu0.b32.cont [5/16] 0.0, 128
      %1152 = vxpose.xlu0.b32.cont [6/16] 0.0, 128
      %1153 = vxpose.xlu0.b32.cont [7/16] 0.0, 128
      %1154 = vxpose.xlu0.b32.cont [8/16] 0.0, 128
      %1155 = vxpose.xlu0.b32.cont [9/16] 0.0, 128
      %1156 = vxpose.xlu0.b32.cont [10/16] 0.0, 128
      %1157 = vxpose.xlu0.b32.cont [11/16] 0.0, 128
      %1158 = vxpose.xlu0.b32.cont [12/16] 0.0, 128
      %1159 = vxpose.xlu0.b32.cont [13/16] 0.0, 128
      %1160 = vxpose.xlu0.b32.cont [14/16] 0.0, 128
      %1161 = vxpose.xlu0.b32.cont [15/16] 0.0, 128
      %1162 = vxpose.xlu0.b32.end [16/16] 0.0, 128
      %v1163 = vpop.trf.xlu0
      %v1164 = vpop.trf.xlu0
      %v1165 = vpop.trf.xlu0
      %v1166 = vpop.trf.xlu0
      %v1167 = vpop.trf.xlu0
      %v1168 = vpop.trf.xlu0
      %v1169 = vpop.trf.xlu0
      %v1170 = vpop.trf.xlu0
      %v1171 = vpop.trf.xlu0
      %v1172 = vpop.trf.xlu0
      %v1173 = vpop.trf.xlu0
      %v1174 = vpop.trf.xlu0
      %v1175 = vpop.trf.xlu0
      %v1176 = vpop.trf.xlu0
      %v1177 = vpop.trf.xlu0
      %v1178 = vpop.trf.xlu0
      %1179 = vxpose.xlu0.b32.start [1/16] %v1082, 128
      %1180 = vxpose.xlu0.b32.cont [2/16] 0.0, 128
      %1181 = vxpose.xlu0.b32.cont [3/16] 0.0, 128
      %1182 = vxpose.xlu0.b32.cont [4/16] 0.0, 128
      %1183 = vxpose.xlu0.b32.cont [5/16] 0.0, 128
      %1184 = vxpose.xlu0.b32.cont [6/16] 0.0, 128
      %1185 = vxpose.xlu0.b32.cont [7/16] 0.0, 128
      %1186 = vxpose.xlu0.b32.cont [8/16] 0.0, 128
      %1187 = vxpose.xlu0.b32.cont [9/16] 0.0, 128
      %1188 = vxpose.xlu0.b32.cont [10/16] 0.0, 128
      %1189 = vxpose.xlu0.b32.cont [11/16] 0.0, 128
      %1190 = vxpose.xlu0.b32.cont [12/16] 0.0, 128
      %1191 = vxpose.xlu0.b32.cont [13/16] 0.0, 128
      %1192 = vxpose.xlu0.b32.cont [14/16] 0.0, 128
      %1193 = vxpose.xlu0.b32.cont [15/16] 0.0, 128
      %1194 = vxpose.xlu0.b32.end [16/16] 0.0, 128
      %v1195 = vpop.trf.xlu0
      %v1196 = vpop.trf.xlu0
      %v1197 = vpop.trf.xlu0
      %v1198 = vpop.trf.xlu0
      %v1199 = vpop.trf.xlu0
      %v1200 = vpop.trf.xlu0
      %v1201 = vpop.trf.xlu0
      %v1202 = vpop.trf.xlu0
      %v1203 = vpop.trf.xlu0
      %v1204 = vpop.trf.xlu0
      %v1205 = vpop.trf.xlu0
      %v1206 = vpop.trf.xlu0
      %v1207 = vpop.trf.xlu0
      %v1208 = vpop.trf.xlu0
      %v1209 = vpop.trf.xlu0
      %v1210 = vpop.trf.xlu0
      %vm1211 = vcmask 31744
      %1212 = vst.msk [vmem:[%s280] sm:$0xff] %vm1211, %v1099
      %1213 = vst.msk [vmem:[%s280 + $0x8] sm:$0xff] %vm1211, %v1100
      %1214 = vst.msk [vmem:[%s280 + $0x10] sm:$0xff] %vm1211, %v1101
      %1215 = vst.msk [vmem:[%s280 + $0x18] sm:$0xff] %vm1211, %v1102
      %1216 = vst.msk [vmem:[%s280 + $0x20] sm:$0xff] %vm1211, %v1103
      %1217 = vst.msk [vmem:[%s280 + $0x28] sm:$0xff] %vm1211, %v1104
      %1218 = vst.msk [vmem:[%s280 + $0x30] sm:$0xff] %vm1211, %v1105
      %1219 = vst.msk [vmem:[%s280 + $0x38] sm:$0xff] %vm1211, %v1106
      %1220 = vst.msk [vmem:[%s280 + $0x40] sm:$0xff] %vm1211, %v1107
      %1221 = vst.msk [vmem:[%s280 + $0x48] sm:$0xff] %vm1211, %v1108
      %1222 = vst.msk [vmem:[%s280 + $0x50] sm:$0xff] %vm1211, %v1109
      %1223 = vst.msk [vmem:[%s280 + $0x58] sm:$0xff] %vm1211, %v1110
      %1224 = vst.msk [vmem:[%s280 + $0x60] sm:$0xff] %vm1211, %v1111
      %1225 = vst.msk [vmem:[%s280 + $0x68] sm:$0xff] %vm1211, %v1112
      %1226 = vst.msk [vmem:[%s280 + $0x70] sm:$0xff] %vm1211, %v1113
      %1227 = vst.msk [vmem:[%s280 + $0x78] sm:$0xff] %vm1211, %v1114
      %1228 = vst.msk [vmem:[%s280 + $0x80] sm:$0xff] %vm1211, %v1131
      %1229 = vst.msk [vmem:[%s280 + $0x88] sm:$0xff] %vm1211, %v1132
      %1230 = vst.msk [vmem:[%s280 + $0x90] sm:$0xff] %vm1211, %v1133
      %1231 = vst.msk [vmem:[%s280 + $0x98] sm:$0xff] %vm1211, %v1134
      %1232 = vst.msk [vmem:[%s280 + $0xa0] sm:$0xff] %vm1211, %v1135
      %1233 = vst.msk [vmem:[%s280 + $0xa8] sm:$0xff] %vm1211, %v1136
      %1234 = vst.msk [vmem:[%s280 + $0xb0] sm:$0xff] %vm1211, %v1137
      %1235 = vst.msk [vmem:[%s280 + $0xb8] sm:$0xff] %vm1211, %v1138
      %1236 = vst.msk [vmem:[%s280 + $0xc0] sm:$0xff] %vm1211, %v1139
      %1237 = vst.msk [vmem:[%s280 + $0xc8] sm:$0xff] %vm1211, %v1140
      %1238 = vst.msk [vmem:[%s280 + $0xd0] sm:$0xff] %vm1211, %v1141
      %1239 = vst.msk [vmem:[%s280 + $0xd8] sm:$0xff] %vm1211, %v1142
      %1240 = vst.msk [vmem:[%s280 + $0xe0] sm:$0xff] %vm1211, %v1143
      %1241 = vst.msk [vmem:[%s280 + $0xe8] sm:$0xff] %vm1211, %v1144
      %1242 = vst.msk [vmem:[%s280 + $0xf0] sm:$0xff] %vm1211, %v1145
      %1243 = vst.msk [vmem:[%s280 + $0xf8] sm:$0xff] %vm1211, %v1146
      %1244 = vst.msk [vmem:[%s280 + $0x100] sm:$0xff] %vm1211, %v1163
      %1245 = vst.msk [vmem:[%s280 + $0x108] sm:$0xff] %vm1211, %v1164
      %1246 = vst.msk [vmem:[%s280 + $0x110] sm:$0xff] %vm1211, %v1165
      %1247 = vst.msk [vmem:[%s280 + $0x118] sm:$0xff] %vm1211, %v1166
      %1248 = vst.msk [vmem:[%s280 + $0x120] sm:$0xff] %vm1211, %v1167
      %1249 = vst.msk [vmem:[%s280 + $0x128] sm:$0xff] %vm1211, %v1168
      %1250 = vst.msk [vmem:[%s280 + $0x130] sm:$0xff] %vm1211, %v1169
      %1251 = vst.msk [vmem:[%s280 + $0x138] sm:$0xff] %vm1211, %v1170
      %1252 = vst.msk [vmem:[%s280 + $0x140] sm:$0xff] %vm1211, %v1171
      %1253 = vst.msk [vmem:[%s280 + $0x148] sm:$0xff] %vm1211, %v1172
      %1254 = vst.msk [vmem:[%s280 + $0x150] sm:$0xff] %vm1211, %v1173
      %1255 = vst.msk [vmem:[%s280 + $0x158] sm:$0xff] %vm1211, %v1174
      %1256 = vst.msk [vmem:[%s280 + $0x160] sm:$0xff] %vm1211, %v1175
      %1257 = vst.msk [vmem:[%s280 + $0x168] sm:$0xff] %vm1211, %v1176
      %1258 = vst.msk [vmem:[%s280 + $0x170] sm:$0xff] %vm1211, %v1177
      %1259 = vst.msk [vmem:[%s280 + $0x178] sm:$0xff] %vm1211, %v1178
      %1260 = vst.msk [vmem:[%s280 + $0x180] sm:$0xff] %vm1211, %v1195
      %1261 = vst.msk [vmem:[%s280 + $0x188] sm:$0xff] %vm1211, %v1196
      %1262 = vst.msk [vmem:[%s280 + $0x190] sm:$0xff] %vm1211, %v1197
      %1263 = vst.msk [vmem:[%s280 + $0x198] sm:$0xff] %vm1211, %v1198
      %1264 = vst.msk [vmem:[%s280 + $0x1a0] sm:$0xff] %vm1211, %v1199
      %1265 = vst.msk [vmem:[%s280 + $0x1a8] sm:$0xff] %vm1211, %v1200
      %1266 = vst.msk [vmem:[%s280 + $0x1b0] sm:$0xff] %vm1211, %v1201
      %1267 = vst.msk [vmem:[%s280 + $0x1b8] sm:$0xff] %vm1211, %v1202
      %1268 = vst.msk [vmem:[%s280 + $0x1c0] sm:$0xff] %vm1211, %v1203
      %1269 = vst.msk [vmem:[%s280 + $0x1c8] sm:$0xff] %vm1211, %v1204
      %1270 = vst.msk [vmem:[%s280 + $0x1d0] sm:$0xff] %vm1211, %v1205
      %1271 = vst.msk [vmem:[%s280 + $0x1d8] sm:$0xff] %vm1211, %v1206
      %1272 = vst.msk [vmem:[%s280 + $0x1e0] sm:$0xff] %vm1211, %v1207
      %1273 = vst.msk [vmem:[%s280 + $0x1e8] sm:$0xff] %vm1211, %v1208
      %1274 = vst.msk [vmem:[%s280 + $0x1f0] sm:$0xff] %vm1211, %v1209
      %1275 = vst.msk [vmem:[%s280 + $0x1f8] sm:$0xff] %vm1211, %v1210
      %s1276 = smul.u32 64, %s18
      %p1277 = scmp.lt.s32.totalorder %s1276, 127
      %s1278 = scalar_select %p1277, %s1276, 127
      %s1279 = smul.addr %s1278, 8
      %s1280 = scalar_lea.vmem %s7, %s1279
      // Predicated region
      $region49: #{mlp_pallas.1} parent=47 // pred_check
        %p1281 = pneg %p188
      $region50: #{mlp_pallas.1} parent=47 // pred_check_branch
        %1283 = sbr.rel (%p1281) target = $region52
      $region51: #{mlp_pallas.1} parent=47 // pred_region
        %s1284 = smul.u32 64, %s18
      $region52: #{mlp_pallas.1} parent=47 // pred_fallthru
        _
    $region48: #{mlp_pallas.1} parent=5 // pred_fallthru
      _
    %p1285 = scmp.le.s32.totalorder 2, %s13
    // Predicated region
    $region53: #{mlp_pallas.1} parent=5 // pred_check
      %p1286 = pneg %p1285
    $region54: #{mlp_pallas.1} parent=5 // pred_check_branch
      %1288 = sbr.rel (%p1286) target = $region56
    $region55: #{mlp_pallas.1} parent=5 // pred_region
      %s1289 = ssub.s32 %s13, 2
      // Predicated region
      $region57: #{mlp_pallas.1} parent=55 // pred_check
        %p1290 = pneg %p194
      $region58: #{mlp_pallas.1} parent=55 // pred_check_branch
        %1292 = sbr.rel (%p1290) target = $region60
      $region59: #{mlp_pallas.1} parent=55 // pred_region
        %s1293 = smul.u32 64, %s19
        %p1294 = scmp.lt.s32.totalorder %s1293, 127
        %s1295 = scalar_select %p1294, %s1293, 127
        %s1296 = smul.addr %s1295, 8
        %s1297 = scalar_lea.vmem %s7, %s1296
      $region60: #{mlp_pallas.1} parent=55 // pred_fallthru
        _
    $region56: #{mlp_pallas.1} parent=5 // pred_fallthru
      _
  $region6: #{mlp_pallas.1} parent=0 // loop_footer
    %s17 = sadd.s32 1, %s13
  $region7: #{mlp_pallas.1} parent=0 // loop_footer_branch
    %12 = sbr.rel target = $region3
  $region8: #{mlp_pallas.1} parent=0 // loop_exit
    _

</llo_original>
